<compile_context>
chip_gen: v7x
topology: tpu7x:2x2x1
jax: 0.10.0
libtpu: 0.0.40
codegen_flags: <defaults>
</compile_context>

<pallas_src>
import jax
import jax.numpy as jnp
from jax import lax
from jax.experimental import pallas as pl
from jax.experimental.pallas import tpu as pltpu


def phoneme_regressor_kernel(
    speech_ref,                 # (B, E)    speech_embeddings
    energy_ref,                 # (B, 1)    energy (unsqueezed in wrapper)
    se_we_ref, se_wen_ref,      # (E, D), (1, D)   split speech_encoder weight
    se_b_ref,                   # (1, D)
    wvo_ref,                    # (L, D, D)  (diag(ln1) @ Wv) @ Wo   (pre-folded)
    wi_ref,                     # (L, D, F)  diag(ln2) @ Wi          (pre-folded)
    wf_ref,                     # (L, F, D)
    lnf_ref,                    # (1, D)     final T5 RMSNorm scale
    fc1_w_ref, fc1_b_ref,       # (D, H), (1, H)   BN gamma/beta folded in
    fc2_w_ref, fc2_b_ref,       # (H, H), (1, H)
    fc3_w_ref, fc3_b_ref,       # (1, H), (1, 1)   fc3 weight as a row vector
    out_ref,                    # (B, 1)
):
    f32 = jnp.float32

    # speech_encoder: Linear(E+1 -> D) with the concat decomposed into
    # speech @ W[:E] + energy * W[E] + b  (K=32-aligned matmul + rank-1 VPU update).
    h = (jnp.dot(speech_ref[...], se_we_ref[...], preferred_element_type=f32)
         + energy_ref[...] * se_wen_ref[...]
         + se_b_ref[...])

    # T5 encoder over a length-1 sequence.  RMSNorm scales are folded into the following
    # weight matrices, so only the un-scaled normalisation remains here.
    num_layers = wvo_ref.shape[0]
    for l in range(num_layers):            # static unroll, L is small
        # self-attention block: softmax over one key == 1  =>  attn = hn @ (Wv@Wo)
        hn = h * lax.rsqrt(jnp.mean(h * h, axis=-1, keepdims=True) + 1e-6)
        h = h + jnp.dot(hn, wvo_ref[l], preferred_element_type=f32)
        # feed-forward block (DenseReluDense, no biases)
        hn = h * lax.rsqrt(jnp.mean(h * h, axis=-1, keepdims=True) + 1e-6)
        ff = jnp.dot(
            jnp.maximum(jnp.dot(hn, wi_ref[l], preferred_element_type=f32), 0.0),
            wf_ref[l], preferred_element_type=f32)
        h = h + ff

    # final_layer_norm (lnf kept explicit: cannot be folded exactly through BN's eps);
    # last_hidden_state[:, 0, :] is implicit (seq_len == 1).
    h = h * lax.rsqrt(jnp.mean(h * h, axis=-1, keepdims=True) + 1e-6) * lnf_ref[...]

    # BatchNorm1d (training mode: biased batch statistics, eps=1e-5).
    # gamma/beta are folded into fc1, so only the normalisation is applied here.
    mu = jnp.mean(h, axis=0, keepdims=True)
    var = jnp.mean((h - mu) * (h - mu), axis=0, keepdims=True)
    z = (h - mu) * lax.rsqrt(var + 1e-5)

    # fc head (Dropout == identity at eval).
    h = jnp.maximum(jnp.dot(z, fc1_w_ref[...], preferred_element_type=f32) + fc1_b_ref[...], 0.0)
    h = jnp.maximum(jnp.dot(h, fc2_w_ref[...], preferred_element_type=f32) + fc2_b_ref[...], 0.0)
    # fc3 to a single output: VPU multiply + lane reduction (no MXU matmul to N=1).
    out_ref[...] = jnp.sum(h * fc3_w_ref[...], axis=-1, keepdims=True) + fc3_b_ref[...]


def fold_params(p, embedding_dim):
    """One-time weight folding (exact): Wv@Wo, RMSNorm scales, BN affine, concat split."""
    E = embedding_dim
    wv_scaled = jnp.transpose(p["ln1"], (0, 2, 1)) * p["wv"]   # diag(ln1) @ Wv
    wi_scaled = jnp.transpose(p["ln2"], (0, 2, 1)) * p["wi"]   # diag(ln2) @ Wi
    return {
        "se_w_emb": p["se_w"][:E, :],                          # (E, D)
        "se_w_en":  p["se_w"][E:E + 1, :],                     # (1, D)
        "se_b":     p["se_b"],
        "wvo":      jnp.matmul(wv_scaled, p["wo"]),            # (L, D, D)
        "wi":       wi_scaled,                                 # (L, D, F)
        "wf":       p["wf"],
        "lnf":      p["lnf"],
        "fc1_w":    p["bn_g"].T * p["fc1_w"],                  # diag(gamma) @ W1
        "fc1_b":    p["fc1_b"] + p["bn_b"] @ p["fc1_w"],       # b1 + beta @ W1
        "fc2_w":    p["fc2_w"],
        "fc2_b":    p["fc2_b"],
        "fc3_w":    p["fc3_w"].T,                              # (1, H) row vector
        "fc3_b":    p["fc3_b"],
    }


def phoneme_regressor(energy, speech_embeddings, folded):
    """energy: (B,) f32, speech_embeddings: (B, E) f32 -> (B, 1) f32."""
    speech = speech_embeddings.astype(jnp.float32)
    energy2d = energy.astype(jnp.float32)[:, None]             # (B, 1)
    B = speech.shape[0]

    order = ("se_w_emb", "se_w_en", "se_b", "wvo", "wi", "wf", "lnf",
             "fc1_w", "fc1_b", "fc2_w", "fc2_b", "fc3_w", "fc3_b")
    inputs = (speech, energy2d) + tuple(folded[k] for k in order)

    vmem = pl.BlockSpec(memory_space=pltpu.MemorySpace.VMEM)   # whole-array, VMEM resident
    return pl.pallas_call(
        phoneme_regressor_kernel,
        out_shape=jax.ShapeDtypeStruct((B, 1), jnp.float32),
        in_specs=[vmem] * len(inputs),
        out_specs=vmem,
    )(*inputs)


def init_params(key, embedding_dim=32, d_model=64, d_ff=128, hidden_dim=64,
                output_dim=1, num_layers=2):
    """Deterministic synthetic parameters (shapes follow the module's __init__)."""
    ks = jax.random.split(key, 16)
    n = lambda k, shp, s=0.05: (s * jax.random.normal(k, shp)).astype(jnp.float32)
    E1 = embedding_dim + 1
    return {
        "se_w": n(ks[0], (E1, d_model)),
        "se_b": n(ks[1], (1, d_model)),
        "wv":  n(ks[2], (num_layers, d_model, d_model)),
        "wo":  n(ks[3], (num_layers, d_model, d_model)),
        "ln1": jnp.ones((num_layers, 1, d_model), jnp.float32),
        "wi":  n(ks[4], (num_layers, d_model, d_ff)),
        "wf":  n(ks[5], (num_layers, d_ff, d_model)),
        "ln2": jnp.ones((num_layers, 1, d_model), jnp.float32),
        "lnf": jnp.ones((1, d_model), jnp.float32),
        "bn_g": 1.0 + n(ks[6], (1, d_model)),
        "bn_b": n(ks[7], (1, d_model)),
        "fc1_w": n(ks[8], (d_model, hidden_dim)),
        "fc1_b": n(ks[9], (1, hidden_dim)),
        "fc2_w": n(ks[10], (hidden_dim, hidden_dim)),
        "fc2_b": n(ks[11], (1, hidden_dim)),
        "fc3_w": n(ks[12], (hidden_dim, output_dim)),
        "fc3_b": n(ks[13], (1, output_dim)),
    }


def _rmsnorm(x, scale, eps=1e-6):
    var = jnp.mean(x * x, axis=-1, keepdims=True)
    return x * lax.rsqrt(var + eps) * scale


def phoneme_regressor_ref(energy, speech_embeddings, p):
    """Pure-JAX reference on the ORIGINAL (unfolded) parameters."""
    x = jnp.concatenate([speech_embeddings, energy[:, None]], axis=1)
    h = x @ p["se_w"] + p["se_b"]
    for l in range(p["wv"].shape[0]):
        hn = _rmsnorm(h, p["ln1"][l])
        h = h + (hn @ p["wv"][l]) @ p["wo"][l]
        hn = _rmsnorm(h, p["ln2"][l])
        h = h + jnp.maximum(hn @ p["wi"][l], 0.0) @ p["wf"][l]
    h = _rmsnorm(h, p["lnf"])
    mu = jnp.mean(h, axis=0, keepdims=True)
    var = jnp.mean((h - mu) ** 2, axis=0, keepdims=True)
    h = (h - mu) * lax.rsqrt(var + 1e-5) * p["bn_g"] + p["bn_b"]
    h = jnp.maximum(h @ p["fc1_w"] + p["fc1_b"], 0.0)
    h = jnp.maximum(h @ p["fc2_w"] + p["fc2_b"], 0.0)
    return h @ p["fc3_w"] + p["fc3_b"]


if __name__ == "__main__":
    key = jax.random.PRNGKey(0)
    k_e, k_s, k_p = jax.random.split(key, 3)

    B, E = 8, 32                                   # small shapes (embedding_dim=32)
    energy = jax.random.normal(k_e, (B,), jnp.float32)
    speech = jax.random.normal(k_s, (B, E), jnp.float32)
    params = init_params(k_p, embedding_dim=E, d_model=64, d_ff=128,
                         hidden_dim=64, output_dim=1, num_layers=2)

    folded = jax.tree_util.tree_map(jax.block_until_ready, fold_params(params, E))

    out = jax.block_until_ready(phoneme_regressor(energy, speech, folded))
    ref = jax.block_until_ready(phoneme_regressor_ref(energy, speech, params))

    assert out.shape == (B, 1), out.shape
    assert jnp.allclose(out, ref, rtol=1e-4, atol=1e-4), (out, ref)
    print("KERNEL_OK")
</pallas_src>

<mosaic_0001>
module attributes {stable_mosaic.version = 11 : i64} {
  func.func @phoneme_regressor_kernel(%arg0: memref<8x32xf32, #tpu.memory_space<vmem>>, %arg1: memref<8x1xf32, #tpu.memory_space<vmem>>, %arg2: memref<32x64xf32, #tpu.memory_space<vmem>>, %arg3: memref<1x64xf32, #tpu.memory_space<vmem>>, %arg4: memref<1x64xf32, #tpu.memory_space<vmem>>, %arg5: memref<2x64x64xf32, #tpu.memory_space<vmem>>, %arg6: memref<2x64x128xf32, #tpu.memory_space<vmem>>, %arg7: memref<2x128x64xf32, #tpu.memory_space<vmem>>, %arg8: memref<1x64xf32, #tpu.memory_space<vmem>>, %arg9: memref<64x64xf32, #tpu.memory_space<vmem>>, %arg10: memref<1x64xf32, #tpu.memory_space<vmem>>, %arg11: memref<64x64xf32, #tpu.memory_space<vmem>>, %arg12: memref<1x64xf32, #tpu.memory_space<vmem>>, %arg13: memref<1x64xf32, #tpu.memory_space<vmem>>, %arg14: memref<1x1xf32, #tpu.memory_space<vmem>>, %arg15: memref<8x1xf32, #tpu.memory_space<vmem>>) attributes {dimension_semantics = [], scalar_prefetch = 0 : i64, scratch_operands = 0 : i64, tpu.core_type = #tpu.core_type<tc>} {
    %c0 = arith.constant 0 : index
    %c0_0 = arith.constant 0 : index
    %0 = vector.load %arg0[%c0, %c0_0] : memref<8x32xf32, #tpu.memory_space<vmem>>, vector<8x32xf32>
    %c0_1 = arith.constant 0 : index
    %c0_2 = arith.constant 0 : index
    %1 = vector.load %arg2[%c0_1, %c0_2] : memref<32x64xf32, #tpu.memory_space<vmem>>, vector<32x64xf32>
    %cst = arith.constant dense<0.000000e+00> : vector<8x64xf32>
    %2 = tpu.matmul %0, %1, %cst {dimension_numbers = #tpu.dot_dimension_numbers<[1], [0], [0], [1], [0, 0, 1, 1], [], []>} : vector<8x32xf32>, vector<32x64xf32>, vector<8x64xf32> -> vector<8x64xf32>
    %c0_3 = arith.constant 0 : index
    %c0_4 = arith.constant 0 : index
    %3 = vector.load %arg1[%c0_3, %c0_4] : memref<8x1xf32, #tpu.memory_space<vmem>>, vector<8x1xf32>
    %c0_5 = arith.constant 0 : index
    %c0_6 = arith.constant 0 : index
    %4 = vector.load %arg3[%c0_5, %c0_6] : memref<1x64xf32, #tpu.memory_space<vmem>>, vector<1x64xf32>
    %5 = vector.broadcast %3 : vector<8x1xf32> to vector<8x64xf32>
    %6 = vector.broadcast %4 : vector<1x64xf32> to vector<8x64xf32>
    %7 = arith.mulf %5, %6 : vector<8x64xf32>
    %8 = arith.addf %2, %7 : vector<8x64xf32>
    %c0_7 = arith.constant 0 : index
    %c0_8 = arith.constant 0 : index
    %9 = vector.load %arg4[%c0_7, %c0_8] : memref<1x64xf32, #tpu.memory_space<vmem>>, vector<1x64xf32>
    %10 = vector.broadcast %9 : vector<1x64xf32> to vector<8x64xf32>
    %11 = arith.addf %8, %10 : vector<8x64xf32>
    %12 = arith.mulf %11, %11 : vector<8x64xf32>
    %cst_9 = arith.constant dense<0.000000e+00> : vector<8xf32>
    %13 = vector.multi_reduction <add>, %12, %cst_9 [1] : vector<8x64xf32> to vector<8xf32>
    %14 = vector.shape_cast %13 : vector<8xf32> to vector<8x1xf32>
    %cst_10 = arith.constant 6.400000e+01 : f32
    %15 = vector.broadcast %cst_10 : f32 to vector<8x1xf32>
    %16 = arith.divf %14, %15 : vector<8x1xf32>
    %cst_11 = arith.constant 9.99999997E-7 : f32
    %17 = vector.broadcast %cst_11 : f32 to vector<8x1xf32>
    %18 = arith.addf %16, %17 : vector<8x1xf32>
    %19 = math.rsqrt %18 : vector<8x1xf32>
    %20 = vector.broadcast %19 : vector<8x1xf32> to vector<8x64xf32>
    %21 = arith.mulf %11, %20 : vector<8x64xf32>
    %c0_12 = arith.constant 0 : index
    %c0_13 = arith.constant 0 : index
    %c0_14 = arith.constant 0 : index
    %22 = vector.load %arg5[%c0_12, %c0_13, %c0_14] : memref<2x64x64xf32, #tpu.memory_space<vmem>>, vector<1x64x64xf32>
    %23 = vector.shape_cast %22 : vector<1x64x64xf32> to vector<64x64xf32>
    %cst_15 = arith.constant dense<0.000000e+00> : vector<8x64xf32>
    %24 = tpu.matmul %21, %23, %cst_15 {dimension_numbers = #tpu.dot_dimension_numbers<[1], [0], [0], [1], [0, 0, 1, 1], [], []>} : vector<8x64xf32>, vector<64x64xf32>, vector<8x64xf32> -> vector<8x64xf32>
    %25 = arith.addf %11, %24 : vector<8x64xf32>
    %26 = arith.mulf %25, %25 : vector<8x64xf32>
    %cst_16 = arith.constant dense<0.000000e+00> : vector<8xf32>
    %27 = vector.multi_reduction <add>, %26, %cst_16 [1] : vector<8x64xf32> to vector<8xf32>
    %28 = vector.shape_cast %27 : vector<8xf32> to vector<8x1xf32>
    %cst_17 = arith.constant 6.400000e+01 : f32
    %29 = vector.broadcast %cst_17 : f32 to vector<8x1xf32>
    %30 = arith.divf %28, %29 : vector<8x1xf32>
    %cst_18 = arith.constant 9.99999997E-7 : f32
    %31 = vector.broadcast %cst_18 : f32 to vector<8x1xf32>
    %32 = arith.addf %30, %31 : vector<8x1xf32>
    %33 = math.rsqrt %32 : vector<8x1xf32>
    %34 = vector.broadcast %33 : vector<8x1xf32> to vector<8x64xf32>
    %35 = arith.mulf %25, %34 : vector<8x64xf32>
    %c0_19 = arith.constant 0 : index
    %c0_20 = arith.constant 0 : index
    %c0_21 = arith.constant 0 : index
    %36 = vector.load %arg6[%c0_19, %c0_20, %c0_21] : memref<2x64x128xf32, #tpu.memory_space<vmem>>, vector<1x64x128xf32>
    %37 = vector.shape_cast %36 : vector<1x64x128xf32> to vector<64x128xf32>
    %cst_22 = arith.constant dense<0.000000e+00> : vector<8x128xf32>
    %38 = tpu.matmul %35, %37, %cst_22 {dimension_numbers = #tpu.dot_dimension_numbers<[1], [0], [0], [1], [0, 0, 1, 1], [], []>} : vector<8x64xf32>, vector<64x128xf32>, vector<8x128xf32> -> vector<8x128xf32>
    %cst_23 = arith.constant 0.000000e+00 : f32
    %39 = vector.broadcast %cst_23 : f32 to vector<8x128xf32>
    %40 = arith.maximumf %38, %39 : vector<8x128xf32>
    %c0_24 = arith.constant 0 : index
    %c0_25 = arith.constant 0 : index
    %c0_26 = arith.constant 0 : index
    %41 = vector.load %arg7[%c0_24, %c0_25, %c0_26] : memref<2x128x64xf32, #tpu.memory_space<vmem>>, vector<1x128x64xf32>
    %42 = vector.shape_cast %41 : vector<1x128x64xf32> to vector<128x64xf32>
    %cst_27 = arith.constant dense<0.000000e+00> : vector<8x64xf32>
    %43 = tpu.matmul %40, %42, %cst_27 {dimension_numbers = #tpu.dot_dimension_numbers<[1], [0], [0], [1], [0, 0, 1, 1], [], []>} : vector<8x128xf32>, vector<128x64xf32>, vector<8x64xf32> -> vector<8x64xf32>
    %44 = arith.addf %25, %43 : vector<8x64xf32>
    %45 = arith.mulf %44, %44 : vector<8x64xf32>
    %cst_28 = arith.constant dense<0.000000e+00> : vector<8xf32>
    %46 = vector.multi_reduction <add>, %45, %cst_28 [1] : vector<8x64xf32> to vector<8xf32>
    %47 = vector.shape_cast %46 : vector<8xf32> to vector<8x1xf32>
    %cst_29 = arith.constant 6.400000e+01 : f32
    %48 = vector.broadcast %cst_29 : f32 to vector<8x1xf32>
    %49 = arith.divf %47, %48 : vector<8x1xf32>
    %cst_30 = arith.constant 9.99999997E-7 : f32
    %50 = vector.broadcast %cst_30 : f32 to vector<8x1xf32>
    %51 = arith.addf %49, %50 : vector<8x1xf32>
    %52 = math.rsqrt %51 : vector<8x1xf32>
    %53 = vector.broadcast %52 : vector<8x1xf32> to vector<8x64xf32>
    %54 = arith.mulf %44, %53 : vector<8x64xf32>
    %c1 = arith.constant 1 : index
    %c0_31 = arith.constant 0 : index
    %c0_32 = arith.constant 0 : index
    %55 = vector.load %arg5[%c1, %c0_31, %c0_32] : memref<2x64x64xf32, #tpu.memory_space<vmem>>, vector<1x64x64xf32>
    %56 = vector.shape_cast %55 : vector<1x64x64xf32> to vector<64x64xf32>
    %cst_33 = arith.constant dense<0.000000e+00> : vector<8x64xf32>
    %57 = tpu.matmul %54, %56, %cst_33 {dimension_numbers = #tpu.dot_dimension_numbers<[1], [0], [0], [1], [0, 0, 1, 1], [], []>} : vector<8x64xf32>, vector<64x64xf32>, vector<8x64xf32> -> vector<8x64xf32>
    %58 = arith.addf %44, %57 : vector<8x64xf32>
    %59 = arith.mulf %58, %58 : vector<8x64xf32>
    %cst_34 = arith.constant dense<0.000000e+00> : vector<8xf32>
    %60 = vector.multi_reduction <add>, %59, %cst_34 [1] : vector<8x64xf32> to vector<8xf32>
    %61 = vector.shape_cast %60 : vector<8xf32> to vector<8x1xf32>
    %cst_35 = arith.constant 6.400000e+01 : f32
    %62 = vector.broadcast %cst_35 : f32 to vector<8x1xf32>
    %63 = arith.divf %61, %62 : vector<8x1xf32>
    %cst_36 = arith.constant 9.99999997E-7 : f32
    %64 = vector.broadcast %cst_36 : f32 to vector<8x1xf32>
    %65 = arith.addf %63, %64 : vector<8x1xf32>
    %66 = math.rsqrt %65 : vector<8x1xf32>
    %67 = vector.broadcast %66 : vector<8x1xf32> to vector<8x64xf32>
    %68 = arith.mulf %58, %67 : vector<8x64xf32>
    %c1_37 = arith.constant 1 : index
    %c0_38 = arith.constant 0 : index
    %c0_39 = arith.constant 0 : index
    %69 = vector.load %arg6[%c1_37, %c0_38, %c0_39] : memref<2x64x128xf32, #tpu.memory_space<vmem>>, vector<1x64x128xf32>
    %70 = vector.shape_cast %69 : vector<1x64x128xf32> to vector<64x128xf32>
    %cst_40 = arith.constant dense<0.000000e+00> : vector<8x128xf32>
    %71 = tpu.matmul %68, %70, %cst_40 {dimension_numbers = #tpu.dot_dimension_numbers<[1], [0], [0], [1], [0, 0, 1, 1], [], []>} : vector<8x64xf32>, vector<64x128xf32>, vector<8x128xf32> -> vector<8x128xf32>
    %cst_41 = arith.constant 0.000000e+00 : f32
    %72 = vector.broadcast %cst_41 : f32 to vector<8x128xf32>
    %73 = arith.maximumf %71, %72 : vector<8x128xf32>
    %c1_42 = arith.constant 1 : index
    %c0_43 = arith.constant 0 : index
    %c0_44 = arith.constant 0 : index
    %74 = vector.load %arg7[%c1_42, %c0_43, %c0_44] : memref<2x128x64xf32, #tpu.memory_space<vmem>>, vector<1x128x64xf32>
    %75 = vector.shape_cast %74 : vector<1x128x64xf32> to vector<128x64xf32>
    %cst_45 = arith.constant dense<0.000000e+00> : vector<8x64xf32>
    %76 = tpu.matmul %73, %75, %cst_45 {dimension_numbers = #tpu.dot_dimension_numbers<[1], [0], [0], [1], [0, 0, 1, 1], [], []>} : vector<8x128xf32>, vector<128x64xf32>, vector<8x64xf32> -> vector<8x64xf32>
    %77 = arith.addf %58, %76 : vector<8x64xf32>
    %78 = arith.mulf %77, %77 : vector<8x64xf32>
    %cst_46 = arith.constant dense<0.000000e+00> : vector<8xf32>
    %79 = vector.multi_reduction <add>, %78, %cst_46 [1] : vector<8x64xf32> to vector<8xf32>
    %80 = vector.shape_cast %79 : vector<8xf32> to vector<8x1xf32>
    %cst_47 = arith.constant 6.400000e+01 : f32
    %81 = vector.broadcast %cst_47 : f32 to vector<8x1xf32>
    %82 = arith.divf %80, %81 : vector<8x1xf32>
    %cst_48 = arith.constant 9.99999997E-7 : f32
    %83 = vector.broadcast %cst_48 : f32 to vector<8x1xf32>
    %84 = arith.addf %82, %83 : vector<8x1xf32>
    %85 = math.rsqrt %84 : vector<8x1xf32>
    %86 = vector.broadcast %85 : vector<8x1xf32> to vector<8x64xf32>
    %87 = arith.mulf %77, %86 : vector<8x64xf32>
    %c0_49 = arith.constant 0 : index
    %c0_50 = arith.constant 0 : index
    %88 = vector.load %arg8[%c0_49, %c0_50] : memref<1x64xf32, #tpu.memory_space<vmem>>, vector<1x64xf32>
    %89 = vector.broadcast %88 : vector<1x64xf32> to vector<8x64xf32>
    %90 = arith.mulf %87, %89 : vector<8x64xf32>
    %cst_51 = arith.constant dense<0.000000e+00> : vector<64xf32>
    %91 = vector.multi_reduction <add>, %90, %cst_51 [0] : vector<8x64xf32> to vector<64xf32>
    %92 = vector.shape_cast %91 : vector<64xf32> to vector<1x64xf32>
    %cst_52 = arith.constant 8.000000e+00 : f32
    %93 = vector.broadcast %cst_52 : f32 to vector<1x64xf32>
    %94 = arith.divf %92, %93 : vector<1x64xf32>
    %95 = vector.broadcast %94 : vector<1x64xf32> to vector<8x64xf32>
    %96 = arith.subf %90, %95 : vector<8x64xf32>
    %97 = vector.broadcast %94 : vector<1x64xf32> to vector<8x64xf32>
    %98 = arith.subf %90, %97 : vector<8x64xf32>
    %99 = arith.mulf %96, %98 : vector<8x64xf32>
    %cst_53 = arith.constant dense<0.000000e+00> : vector<64xf32>
    %100 = vector.multi_reduction <add>, %99, %cst_53 [0] : vector<8x64xf32> to vector<64xf32>
    %101 = vector.shape_cast %100 : vector<64xf32> to vector<1x64xf32>
    %cst_54 = arith.constant 8.000000e+00 : f32
    %102 = vector.broadcast %cst_54 : f32 to vector<1x64xf32>
    %103 = arith.divf %101, %102 : vector<1x64xf32>
    %104 = vector.broadcast %94 : vector<1x64xf32> to vector<8x64xf32>
    %105 = arith.subf %90, %104 : vector<8x64xf32>
    %cst_55 = arith.constant 9.99999974E-6 : f32
    %106 = vector.broadcast %cst_55 : f32 to vector<1x64xf32>
    %107 = arith.addf %103, %106 : vector<1x64xf32>
    %108 = math.rsqrt %107 : vector<1x64xf32>
    %109 = vector.broadcast %108 : vector<1x64xf32> to vector<8x64xf32>
    %110 = arith.mulf %105, %109 : vector<8x64xf32>
    %c0_56 = arith.constant 0 : index
    %c0_57 = arith.constant 0 : index
    %111 = vector.load %arg9[%c0_56, %c0_57] : memref<64x64xf32, #tpu.memory_space<vmem>>, vector<64x64xf32>
    %cst_58 = arith.constant dense<0.000000e+00> : vector<8x64xf32>
    %112 = tpu.matmul %110, %111, %cst_58 {dimension_numbers = #tpu.dot_dimension_numbers<[1], [0], [0], [1], [0, 0, 1, 1], [], []>} : vector<8x64xf32>, vector<64x64xf32>, vector<8x64xf32> -> vector<8x64xf32>
    %c0_59 = arith.constant 0 : index
    %c0_60 = arith.constant 0 : index
    %113 = vector.load %arg10[%c0_59, %c0_60] : memref<1x64xf32, #tpu.memory_space<vmem>>, vector<1x64xf32>
    %114 = vector.broadcast %113 : vector<1x64xf32> to vector<8x64xf32>
    %115 = arith.addf %112, %114 : vector<8x64xf32>
    %cst_61 = arith.constant 0.000000e+00 : f32
    %116 = vector.broadcast %cst_61 : f32 to vector<8x64xf32>
    %117 = arith.maximumf %115, %116 : vector<8x64xf32>
    %c0_62 = arith.constant 0 : index
    %c0_63 = arith.constant 0 : index
    %118 = vector.load %arg11[%c0_62, %c0_63] : memref<64x64xf32, #tpu.memory_space<vmem>>, vector<64x64xf32>
    %cst_64 = arith.constant dense<0.000000e+00> : vector<8x64xf32>
    %119 = tpu.matmul %117, %118, %cst_64 {dimension_numbers = #tpu.dot_dimension_numbers<[1], [0], [0], [1], [0, 0, 1, 1], [], []>} : vector<8x64xf32>, vector<64x64xf32>, vector<8x64xf32> -> vector<8x64xf32>
    %c0_65 = arith.constant 0 : index
    %c0_66 = arith.constant 0 : index
    %120 = vector.load %arg12[%c0_65, %c0_66] : memref<1x64xf32, #tpu.memory_space<vmem>>, vector<1x64xf32>
    %121 = vector.broadcast %120 : vector<1x64xf32> to vector<8x64xf32>
    %122 = arith.addf %119, %121 : vector<8x64xf32>
    %cst_67 = arith.constant 0.000000e+00 : f32
    %123 = vector.broadcast %cst_67 : f32 to vector<8x64xf32>
    %124 = arith.maximumf %122, %123 : vector<8x64xf32>
    %c0_68 = arith.constant 0 : index
    %c0_69 = arith.constant 0 : index
    %125 = vector.load %arg13[%c0_68, %c0_69] : memref<1x64xf32, #tpu.memory_space<vmem>>, vector<1x64xf32>
    %126 = vector.broadcast %125 : vector<1x64xf32> to vector<8x64xf32>
    %127 = arith.mulf %124, %126 : vector<8x64xf32>
    %cst_70 = arith.constant dense<0.000000e+00> : vector<8xf32>
    %128 = vector.multi_reduction <add>, %127, %cst_70 [1] : vector<8x64xf32> to vector<8xf32>
    %129 = vector.shape_cast %128 : vector<8xf32> to vector<8x1xf32>
    %c0_71 = arith.constant 0 : index
    %c0_72 = arith.constant 0 : index
    %130 = vector.load %arg14[%c0_71, %c0_72] : memref<1x1xf32, #tpu.memory_space<vmem>>, vector<1x1xf32>
    %131 = vector.broadcast %130 : vector<1x1xf32> to vector<8x1xf32>
    %132 = arith.addf %129, %131 : vector<8x1xf32>
    %c0_73 = arith.constant 0 : index
    %c0_74 = arith.constant 0 : index
    %133 = vector.load %arg15[%c0_73, %c0_74] : memref<8x1xf32, #tpu.memory_space<vmem>>, vector<8x1xf32>
    tpu.vector_store %arg15[%c0_73, %c0_74], %132 {strides = array<i32>} : memref<8x1xf32, #tpu.memory_space<vmem>>, vector<8x1xf32>,
    return
  }
}

</mosaic_0001>

<llo_original>
// kernel: tpu_custom_call.1
$region0: #{tpu_custom_call.1}
  #allocation0 [shape = 'u32[]', space=smem, size = 0x4, offset = 0x4, fixed_abs, tag = 'smem constant byte address 0x4 - core index']
  #allocation1 [shape = 'u32[144,128]{1,0:T(1,128)}', space=vmem, size = 0x12000, scoped, tag = 'internal scratch']
  #allocation2 [shape = 'f32[1,1]{1,0:T(1,128)S(1)}', space=vmem, size = 0x200, scoped, tag = 'scoped memory for tpu_custom_call.1']
  %s0 = inlined_call_operand.vmem [shape: f32[8,32], index: 0, kind: input, shape index: {}]
  %s1 = inlined_call_operand.vmem [shape: f32[8,1], index: 1, kind: input, shape index: {}]
  %s2 = inlined_call_operand.hbm [shape: f32[32,64], index: 2, kind: input, shape index: {}]
  %s3 = inlined_call_operand.vmem [shape: f32[1,64], index: 3, kind: input, shape index: {}]
  %s4 = inlined_call_operand.vmem [shape: f32[1,64], index: 4, kind: input, shape index: {}]
  %s5 = inlined_call_operand.vmem [shape: f32[2,64,64], index: 5, kind: input, shape index: {}]
  %s6 = inlined_call_operand.vmem [shape: f32[2,64,128], index: 6, kind: input, shape index: {}]
  %s7 = inlined_call_operand.vmem [shape: f32[2,128,64], index: 7, kind: input, shape index: {}]
  %s8 = inlined_call_operand.vmem [shape: f32[1,64], index: 8, kind: input, shape index: {}]
  %s9 = inlined_call_operand.vmem [shape: f32[64,64], index: 9, kind: input, shape index: {}]
  %s10 = inlined_call_operand.vmem [shape: f32[1,64], index: 10, kind: input, shape index: {}]
  %s11 = inlined_call_operand.vmem [shape: f32[64,64], index: 11, kind: input, shape index: {}]
  %s12 = inlined_call_operand.vmem [shape: f32[1,64], index: 12, kind: input, shape index: {}]
  %s13 = inlined_call_operand.vmem [shape: f32[1,64], index: 13, kind: input, shape index: {}]
  %s14 = inlined_call_operand.<no memory space> [shape: f32[1,1], index: 14, kind: input, shape index: {}]
  %s15 = inlined_call_operand.vmem [shape: f32[8,1], index: 15, kind: output, shape index: {}]
  %s16 = sld [smem:[#allocation0]]
  $region74: #{tpu_custom_call.1} parent=0
    _
  %s18 = ssub.s32 1, %s16
  %s19 = scalar_select 0, %s18, %s16
  %v20 = vstv %s14
  %21 = vst [vmem:[#allocation2] sm:$0x1] %v20
  $region1: #{tpu_custom_call.1} parent=0
    #allocation3 [shape = 'u8[16384]{0}', space=vmem, size = 0x4000, scoped, tag = 'input window, operand 2, single buffered']
    #allocation4 [shape = 's32[1]{0}', space=sflag, size = 0x4, scoped, tag = 'scoped memory for tpu_custom_call.1']
    %22 = vsyncpa [#allocation4], 0
    // Predicated region
    $region2: #{tpu_custom_call.1} parent=1 // pred_check
      _
    $region3: #{tpu_custom_call.1} parent=1 // pred_check_branch
      %24 = sbr.rel (0) target = $region5
    $region4: #{tpu_custom_call.1} parent=1 // pred_region
      _
    $region5: #{tpu_custom_call.1} parent=1 // pred_fallthru
      _
    // Predicated region
    $region6: #{tpu_custom_call.1} parent=1 // pred_check
      _
    $region7: #{tpu_custom_call.1} parent=1 // pred_check_branch
      %26 = sbr.rel (0) target = $region9
    $region8: #{tpu_custom_call.1} parent=1 // pred_region
      _
    $region9: #{tpu_custom_call.1} parent=1 // pred_fallthru
      _
    // Predicated region
    $region10: #{tpu_custom_call.1} parent=1 // pred_check
      _
    $region11: #{tpu_custom_call.1} parent=1 // pred_check_branch
      %28 = sbr.rel (0) target = $region13
    $region12: #{tpu_custom_call.1} parent=1 // pred_region
      %s30 = ssub.s32 512, 512
      %31 = vsyncadd [#allocation4], %s30
      %s32 = sshll.u32 [#allocation3], 4
      %s33 = int_to_ptr.vmem [resolvable:$true] %s32
      %38 = dma.hbm_to_vmem [thread:$0]  %s2, 512, %s33, [#allocation4], 128, 128, 8
    $region13: #{tpu_custom_call.1} parent=1 // pred_fallthru
      _
    // Predicated region
    $region14: #{tpu_custom_call.1} parent=1 // pred_check
      _
    $region15: #{tpu_custom_call.1} parent=1 // pred_check_branch
      %40 = sbr.rel (0) target = $region17
    $region16: #{tpu_custom_call.1} parent=1 // pred_region
      _
    $region17: #{tpu_custom_call.1} parent=1 // pred_fallthru
      _
    // Predicated region
    $region18: #{tpu_custom_call.1} parent=1 // pred_check
      _
    $region19: #{tpu_custom_call.1} parent=1 // pred_check_branch
      %42 = sbr.rel (0) target = $region21
    $region20: #{tpu_custom_call.1} parent=1 // pred_region
      _
    $region21: #{tpu_custom_call.1} parent=1 // pred_fallthru
      _
    // Predicated region
    $region22: #{tpu_custom_call.1} parent=1 // pred_check
      _
    $region23: #{tpu_custom_call.1} parent=1 // pred_check_branch
      %44 = sbr.rel (0) target = $region25
    $region24: #{tpu_custom_call.1} parent=1 // pred_region
      _
    $region25: #{tpu_custom_call.1} parent=1 // pred_fallthru
      _
    // Predicated region
    $region26: #{tpu_custom_call.1} parent=1 // pred_check
      _
    $region27: #{tpu_custom_call.1} parent=1 // pred_check_branch
      %46 = sbr.rel (0) target = $region29
    $region28: #{tpu_custom_call.1} parent=1 // pred_region
      _
    $region29: #{tpu_custom_call.1} parent=1 // pred_fallthru
      _
    // Predicated region
    $region30: #{tpu_custom_call.1} parent=1 // pred_check
      _
    $region31: #{tpu_custom_call.1} parent=1 // pred_check_branch
      %48 = sbr.rel (0) target = $region33
    $region32: #{tpu_custom_call.1} parent=1 // pred_region
      _
    $region33: #{tpu_custom_call.1} parent=1 // pred_fallthru
      _
    // Predicated region
    $region34: #{tpu_custom_call.1} parent=1 // pred_check
      _
    $region35: #{tpu_custom_call.1} parent=1 // pred_check_branch
      %50 = sbr.rel (0) target = $region37
    $region36: #{tpu_custom_call.1} parent=1 // pred_region
      _
    $region37: #{tpu_custom_call.1} parent=1 // pred_fallthru
      _
    // Predicated region
    $region38: #{tpu_custom_call.1} parent=1 // pred_check
      _
    $region39: #{tpu_custom_call.1} parent=1 // pred_check_branch
      %52 = sbr.rel (0) target = $region41
    $region40: #{tpu_custom_call.1} parent=1 // pred_region
      _
    $region41: #{tpu_custom_call.1} parent=1 // pred_fallthru
      _
    // Predicated region
    $region42: #{tpu_custom_call.1} parent=1 // pred_check
      _
    $region43: #{tpu_custom_call.1} parent=1 // pred_check_branch
      %54 = sbr.rel (0) target = $region45
    $region44: #{tpu_custom_call.1} parent=1 // pred_region
      _
    $region45: #{tpu_custom_call.1} parent=1 // pred_fallthru
      _
    // Predicated region
    $region46: #{tpu_custom_call.1} parent=1 // pred_check
      _
    $region47: #{tpu_custom_call.1} parent=1 // pred_check_branch
      %56 = sbr.rel (0) target = $region49
    $region48: #{tpu_custom_call.1} parent=1 // pred_region
      _
    $region49: #{tpu_custom_call.1} parent=1 // pred_fallthru
      _
    // Predicated region
    $region50: #{tpu_custom_call.1} parent=1 // pred_check
      _
    $region51: #{tpu_custom_call.1} parent=1 // pred_check_branch
      %58 = sbr.rel (0) target = $region53
    $region52: #{tpu_custom_call.1} parent=1 // pred_region
      _
    $region53: #{tpu_custom_call.1} parent=1 // pred_fallthru
      _
    // Predicated region
    $region54: #{tpu_custom_call.1} parent=1 // pred_check
      _
    $region55: #{tpu_custom_call.1} parent=1 // pred_check_branch
      %60 = sbr.rel (0) target = $region57
    $region56: #{tpu_custom_call.1} parent=1 // pred_region
      _
    $region57: #{tpu_custom_call.1} parent=1 // pred_fallthru
      _
    // Predicated region
    $region58: #{tpu_custom_call.1} parent=1 // pred_check
      _
    $region59: #{tpu_custom_call.1} parent=1 // pred_check_branch
      %62 = sbr.rel (0) target = $region61
    $region60: #{tpu_custom_call.1} parent=1 // pred_region
      _
    $region61: #{tpu_custom_call.1} parent=1 // pred_fallthru
      _
    // Predicated region
    $region62: #{tpu_custom_call.1} parent=1 // pred_check
      _
    $region63: #{tpu_custom_call.1} parent=1 // pred_check_branch
      %64 = sbr.rel (0) target = $region65
    $region64: #{tpu_custom_call.1} parent=1 // pred_region
      %65 = dma.done [#allocation4], 512
    $region65: #{tpu_custom_call.1} parent=1 // pred_fallthru
      _
    %v66 = vld [vmem:[%s0] sm:$0xff]
    %v67 = vld [vmem:[#allocation3] sm:$0xff]
    %v68 = vld [vmem:[#allocation3 + $0x8] sm:$0xff]
    %v69 = vld [vmem:[#allocation3 + $0x10] sm:$0xff]
    %v70 = vld [vmem:[#allocation3 + $0x18] sm:$0xff]
    %v71 = vld [vmem:[%s1] sm:$0xff]
    %v72 = vld [vmem:[%s3] sm:$0x1]
    %74 = vset.pattern.permute.xlu0 0
    %75 = vperm.xlu0 %74, %v71
    %v76 = vpop.permute.xlu0 %75
    %v79 = vlaneseq
    %v80 = vshrl.u32 %v79, 7
    %v81 = vsub.s32 0, %v80
    %v82 = vrot.slane %v72, %v81
    %v84 = vmul.f32 %v76, %v82
    %vm85 = vcmask 261120
    %v87 = vsel %vm85, %v66, 0
    %89 = vmatprep.subr.mxu0 0.0
    %90 = vmatpush1.msra.mxu0 %v67
    %91 = vmatprep.subr.mxu0 0.0
    %92 = vmatpush1.msra.mxu0 %v68
    %93 = vmatprep.subr.mxu0 0.0
    %94 = vmatpush1.msra.mxu0 %v69
    %95 = vmatprep.subr.mxu0 0.0
    %96 = vmatpush1.msra.mxu0 %v70
    %97 = vmatprep.subr.mxu0 0.0
    %98 = vmatpush1.msra.mxu0 0.0
    %99 = vmatprep.subr.mxu0 0.0
    %100 = vmatpush1.msra.mxu0 0.0
    %101 = vmatprep.subr.mxu0 0.0
    %102 = vmatpush1.msra.mxu0 0.0
    %103 = vmatprep.subr.mxu0 0.0
    %104 = vmatpush1.msra.mxu0 0.0
    %105 = vmatprep.subr.mxu0 0.0
    %106 = vmatpush1.msra.mxu0 0.0
    %107 = vmatprep.subr.mxu0 0.0
    %108 = vmatpush1.msra.mxu0 0.0
    %109 = vmatprep.subr.mxu0 0.0
    %110 = vmatpush1.msra.mxu0 0.0
    %111 = vmatprep.subr.mxu0 0.0
    %112 = vmatpush1.msra.mxu0 0.0
    %113 = vmatprep.subr.mxu0 0.0
    %114 = vmatpush1.msra.mxu0 0.0
    %115 = vmatprep.subr.mxu0 0.0
    %116 = vmatpush1.msra.mxu0 0.0
    %117 = vmatprep.subr.mxu0 0.0
    %118 = vmatpush1.msra.mxu0 0.0
    %119 = vmatprep.subr.mxu0 0.0
    %120 = vmatpush1.msra.mxu0 0.0
    %121 = vmatprep.subr.mxu0 0.0
    %122 = vmatpush1.msra.mxu0 0.0
    %123 = vmatprep.subr.mxu0 0.0
    %124 = vmatpush1.msra.mxu0 0.0
    %125 = vmatprep.subr.mxu0 0.0
    %126 = vmatpush1.msra.mxu0 0.0
    %127 = vmatprep.subr.mxu0 0.0
    %128 = vmatpush1.msra.mxu0 0.0
    %129 = vmatprep.subr.mxu0 0.0
    %130 = vmatpush1.msra.mxu0 0.0
    %131 = vmatprep.subr.mxu0 0.0
    %132 = vmatpush1.msra.mxu0 0.0
    %133 = vmatprep.subr.mxu0 0.0
    %134 = vmatpush1.msra.mxu0 0.0
    %135 = vmatprep.subr.mxu0 0.0
    %136 = vmatpush1.msra.mxu0 0.0
    %137 = vmatprep.subr.mxu0 0.0
    %138 = vmatpush1.msra.mxu0 0.0
    %139 = vmatprep.subr.mxu0 0.0
    %140 = vmatpush1.msra.mxu0 0.0
    %141 = vmatprep.subr.mxu0 0.0
    %142 = vmatpush1.msra.mxu0 0.0
    %143 = vmatprep.subr.mxu0 0.0
    %144 = vmatpush1.msra.mxu0 0.0
    %145 = vmatprep.subr.mxu0 0.0
    %146 = vmatpush1.msra.mxu0 0.0
    %147 = vmatprep.subr.mxu0 0.0
    %148 = vmatpush1.msra.mxu0 0.0
    %149 = vmatprep.subr.mxu0 0.0
    %150 = vmatpush1.msra.mxu0 0.0
    %151 = vmatprep.subr.mxu0 0.0
    %152 = vmatpush1.msra.mxu0 0.0
    %153 = vmatprep.mubr.f32.mxu0 0.0
    %154 = vmatmul.mubr.f32.gmra.mrb[0].mxu0 %v87
    %v155 = vpop.f32.mrb[0].mxu0
    %v156 = vadd.f32 %v84, %v155
    %v157 = vpop.f32.mrb[0].mxu0
    %158 = vdwg.mxu0
    %v159 = vld [vmem:[%s4] sm:$0x1]
    %v161 = vlaneseq
    %v162 = vshrl.u32 %v161, 7
    %v163 = vsub.s32 0, %v162
    %v164 = vrot.slane %v159, %v163
    %v166 = vadd.f32 %v156, %v164
    %v167 = vmul.f32 %v166, %v166
    %vm168 = vcmask 523264
    %v169 = vsel %vm168, %v167, 0.0
    %170 = vadd.xlane.f32.xlu0 %v169
    %v171 = vpop.xlane.xlu0 %170
    %v172 = vrcp.pop 64.0
    %v173 = vmul.f32 %v171, %v172
    %v174 = vadd.f32 %v173, 1e-06
    %v175 = vrsqrt.pop %v174
    %v176 = vmul.f32 %v166, %v175
    %v177 = vld [vmem:[%s5] sm:$0xff]
    %v178 = vld [vmem:[%s5 + $0x8] sm:$0xff]
    %v179 = vld [vmem:[%s5 + $0x10] sm:$0xff]
    %v180 = vld [vmem:[%s5 + $0x18] sm:$0xff]
    %v181 = vld [vmem:[%s5 + $0x20] sm:$0xff]
    %v182 = vld [vmem:[%s5 + $0x28] sm:$0xff]
    %v183 = vld [vmem:[%s5 + $0x30] sm:$0xff]
    %v184 = vld [vmem:[%s5 + $0x38] sm:$0xff]
    %v186 = vsel %vm168, %v176, 0
    %188 = vmatprep.subr.mxu0 0.0
    %189 = vmatpush1.msra.mxu0 %v177
    %190 = vmatprep.subr.mxu0 0.0
    %191 = vmatpush1.msra.mxu0 %v178
    %192 = vmatprep.subr.mxu0 0.0
    %193 = vmatpush1.msra.mxu0 %v179
    %194 = vmatprep.subr.mxu0 0.0
    %195 = vmatpush1.msra.mxu0 %v180
    %196 = vmatprep.subr.mxu0 0.0
    %197 = vmatpush1.msra.mxu0 %v181
    %198 = vmatprep.subr.mxu0 0.0
    %199 = vmatpush1.msra.mxu0 %v182
    %200 = vmatprep.subr.mxu0 0.0
    %201 = vmatpush1.msra.mxu0 %v183
    %202 = vmatprep.subr.mxu0 0.0
    %203 = vmatpush1.msra.mxu0 %v184
    %204 = vmatprep.subr.mxu0 0.0
    %205 = vmatpush1.msra.mxu0 0.0
    %206 = vmatprep.subr.mxu0 0.0
    %207 = vmatpush1.msra.mxu0 0.0
    %208 = vmatprep.subr.mxu0 0.0
    %209 = vmatpush1.msra.mxu0 0.0
    %210 = vmatprep.subr.mxu0 0.0
    %211 = vmatpush1.msra.mxu0 0.0
    %212 = vmatprep.subr.mxu0 0.0
    %213 = vmatpush1.msra.mxu0 0.0
    %214 = vmatprep.subr.mxu0 0.0
    %215 = vmatpush1.msra.mxu0 0.0
    %216 = vmatprep.subr.mxu0 0.0
    %217 = vmatpush1.msra.mxu0 0.0
    %218 = vmatprep.subr.mxu0 0.0
    %219 = vmatpush1.msra.mxu0 0.0
    %220 = vmatprep.subr.mxu0 0.0
    %221 = vmatpush1.msra.mxu0 0.0
    %222 = vmatprep.subr.mxu0 0.0
    %223 = vmatpush1.msra.mxu0 0.0
    %224 = vmatprep.subr.mxu0 0.0
    %225 = vmatpush1.msra.mxu0 0.0
    %226 = vmatprep.subr.mxu0 0.0
    %227 = vmatpush1.msra.mxu0 0.0
    %228 = vmatprep.subr.mxu0 0.0
    %229 = vmatpush1.msra.mxu0 0.0
    %230 = vmatprep.subr.mxu0 0.0
    %231 = vmatpush1.msra.mxu0 0.0
    %232 = vmatprep.subr.mxu0 0.0
    %233 = vmatpush1.msra.mxu0 0.0
    %234 = vmatprep.subr.mxu0 0.0
    %235 = vmatpush1.msra.mxu0 0.0
    %236 = vmatprep.subr.mxu0 0.0
    %237 = vmatpush1.msra.mxu0 0.0
    %238 = vmatprep.subr.mxu0 0.0
    %239 = vmatpush1.msra.mxu0 0.0
    %240 = vmatprep.subr.mxu0 0.0
    %241 = vmatpush1.msra.mxu0 0.0
    %242 = vmatprep.subr.mxu0 0.0
    %243 = vmatpush1.msra.mxu0 0.0
    %244 = vmatprep.subr.mxu0 0.0
    %245 = vmatpush1.msra.mxu0 0.0
    %246 = vmatprep.subr.mxu0 0.0
    %247 = vmatpush1.msra.mxu0 0.0
    %248 = vmatprep.subr.mxu0 0.0
    %249 = vmatpush1.msra.mxu0 0.0
    %250 = vmatprep.subr.mxu0 0.0
    %251 = vmatpush1.msra.mxu0 0.0
    %252 = vmatprep.mubr.f32.mxu0 0.0
    %253 = vmatmul.mubr.f32.gmra.mrb[0].mxu0 %v186
    %v254 = vpop.f32.mrb[0].mxu0
    %v255 = vadd.f32 0.0, %v254
    %v256 = vpop.f32.mrb[0].mxu0
    %257 = vdwg.mxu0
    %v258 = vadd.f32 %v166, %v255
    %v259 = vmul.f32 %v258, %v258
    %v260 = vsel %vm168, %v259, 0.0
    %261 = vadd.xlane.f32.xlu0 %v260
    %v262 = vpop.xlane.xlu0 %261
    %v263 = vmul.f32 %v262, %v172
    %v264 = vadd.f32 %v263, 1e-06
    %v265 = vrsqrt.pop %v264
    %v266 = vmul.f32 %v258, %v265
    %v267 = vld [vmem:[%s6] sm:$0xff]
    %v268 = vld [vmem:[%s6 + $0x8] sm:$0xff]
    %v269 = vld [vmem:[%s6 + $0x10] sm:$0xff]
    %v270 = vld [vmem:[%s6 + $0x18] sm:$0xff]
    %v271 = vld [vmem:[%s6 + $0x20] sm:$0xff]
    %v272 = vld [vmem:[%s6 + $0x28] sm:$0xff]
    %v273 = vld [vmem:[%s6 + $0x30] sm:$0xff]
    %v274 = vld [vmem:[%s6 + $0x38] sm:$0xff]
    %v276 = vsel %vm168, %v266, 0
    %278 = vmatprep.subr.mxu0 0.0
    %279 = vmatpush1.msra.mxu0 %v267
    %280 = vmatprep.subr.mxu0 0.0
    %281 = vmatpush1.msra.mxu0 %v268
    %282 = vmatprep.subr.mxu0 0.0
    %283 = vmatpush1.msra.mxu0 %v269
    %284 = vmatprep.subr.mxu0 0.0
    %285 = vmatpush1.msra.mxu0 %v270
    %286 = vmatprep.subr.mxu0 0.0
    %287 = vmatpush1.msra.mxu0 %v271
    %288 = vmatprep.subr.mxu0 0.0
    %289 = vmatpush1.msra.mxu0 %v272
    %290 = vmatprep.subr.mxu0 0.0
    %291 = vmatpush1.msra.mxu0 %v273
    %292 = vmatprep.subr.mxu0 0.0
    %293 = vmatpush1.msra.mxu0 %v274
    %294 = vmatprep.subr.mxu0 0.0
    %295 = vmatpush1.msra.mxu0 0.0
    %296 = vmatprep.subr.mxu0 0.0
    %297 = vmatpush1.msra.mxu0 0.0
    %298 = vmatprep.subr.mxu0 0.0
    %299 = vmatpush1.msra.mxu0 0.0
    %300 = vmatprep.subr.mxu0 0.0
    %301 = vmatpush1.msra.mxu0 0.0
    %302 = vmatprep.subr.mxu0 0.0
    %303 = vmatpush1.msra.mxu0 0.0
    %304 = vmatprep.subr.mxu0 0.0
    %305 = vmatpush1.msra.mxu0 0.0
    %306 = vmatprep.subr.mxu0 0.0
    %307 = vmatpush1.msra.mxu0 0.0
    %308 = vmatprep.subr.mxu0 0.0
    %309 = vmatpush1.msra.mxu0 0.0
    %310 = vmatprep.subr.mxu0 0.0
    %311 = vmatpush1.msra.mxu0 0.0
    %312 = vmatprep.subr.mxu0 0.0
    %313 = vmatpush1.msra.mxu0 0.0
    %314 = vmatprep.subr.mxu0 0.0
    %315 = vmatpush1.msra.mxu0 0.0
    %316 = vmatprep.subr.mxu0 0.0
    %317 = vmatpush1.msra.mxu0 0.0
    %318 = vmatprep.subr.mxu0 0.0
    %319 = vmatpush1.msra.mxu0 0.0
    %320 = vmatprep.subr.mxu0 0.0
    %321 = vmatpush1.msra.mxu0 0.0
    %322 = vmatprep.subr.mxu0 0.0
    %323 = vmatpush1.msra.mxu0 0.0
    %324 = vmatprep.subr.mxu0 0.0
    %325 = vmatpush1.msra.mxu0 0.0
    %326 = vmatprep.subr.mxu0 0.0
    %327 = vmatpush1.msra.mxu0 0.0
    %328 = vmatprep.subr.mxu0 0.0
    %329 = vmatpush1.msra.mxu0 0.0
    %330 = vmatprep.subr.mxu0 0.0
    %331 = vmatpush1.msra.mxu0 0.0
    %332 = vmatprep.subr.mxu0 0.0
    %333 = vmatpush1.msra.mxu0 0.0
    %334 = vmatprep.subr.mxu0 0.0
    %335 = vmatpush1.msra.mxu0 0.0
    %336 = vmatprep.subr.mxu0 0.0
    %337 = vmatpush1.msra.mxu0 0.0
    %338 = vmatprep.subr.mxu0 0.0
    %339 = vmatpush1.msra.mxu0 0.0
    %340 = vmatprep.subr.mxu0 0.0
    %341 = vmatpush1.msra.mxu0 0.0
    %342 = vmatprep.mubr.f32.mxu0 0.0
    %343 = vmatmul.mubr.f32.gmra.mrb[0].mxu0 %v276
    %v344 = vpop.f32.mrb[0].mxu0
    %v345 = vadd.f32 0.0, %v344
    %v346 = vpop.f32.mrb[0].mxu0
    %347 = vdwg.mxu0
    %v348 = vmax.f32 %v345, 0.0
    %v349 = vld [vmem:[%s7] sm:$0xff]
    %v350 = vld [vmem:[%s7 + $0x8] sm:$0xff]
    %v351 = vld [vmem:[%s7 + $0x10] sm:$0xff]
    %v352 = vld [vmem:[%s7 + $0x18] sm:$0xff]
    %v353 = vld [vmem:[%s7 + $0x20] sm:$0xff]
    %v354 = vld [vmem:[%s7 + $0x28] sm:$0xff]
    %v355 = vld [vmem:[%s7 + $0x30] sm:$0xff]
    %v356 = vld [vmem:[%s7 + $0x38] sm:$0xff]
    %v357 = vld [vmem:[%s7 + $0x40] sm:$0xff]
    %v358 = vld [vmem:[%s7 + $0x48] sm:$0xff]
    %v359 = vld [vmem:[%s7 + $0x50] sm:$0xff]
    %v360 = vld [vmem:[%s7 + $0x58] sm:$0xff]
    %v361 = vld [vmem:[%s7 + $0x60] sm:$0xff]
    %v362 = vld [vmem:[%s7 + $0x68] sm:$0xff]
    %v363 = vld [vmem:[%s7 + $0x70] sm:$0xff]
    %v364 = vld [vmem:[%s7 + $0x78] sm:$0xff]
    %365 = vmatprep.subr.mxu0 0.0
    %366 = vmatpush1.msra.mxu0 %v349
    %367 = vmatprep.subr.mxu0 0.0
    %368 = vmatpush1.msra.mxu0 %v350
    %369 = vmatprep.subr.mxu0 0.0
    %370 = vmatpush1.msra.mxu0 %v351
    %371 = vmatprep.subr.mxu0 0.0
    %372 = vmatpush1.msra.mxu0 %v352
    %373 = vmatprep.subr.mxu0 0.0
    %374 = vmatpush1.msra.mxu0 %v353
    %375 = vmatprep.subr.mxu0 0.0
    %376 = vmatpush1.msra.mxu0 %v354
    %377 = vmatprep.subr.mxu0 0.0
    %378 = vmatpush1.msra.mxu0 %v355
    %379 = vmatprep.subr.mxu0 0.0
    %380 = vmatpush1.msra.mxu0 %v356
    %381 = vmatprep.subr.mxu0 0.0
    %382 = vmatpush1.msra.mxu0 %v357
    %383 = vmatprep.subr.mxu0 0.0
    %384 = vmatpush1.msra.mxu0 %v358
    %385 = vmatprep.subr.mxu0 0.0
    %386 = vmatpush1.msra.mxu0 %v359
    %387 = vmatprep.subr.mxu0 0.0
    %388 = vmatpush1.msra.mxu0 %v360
    %389 = vmatprep.subr.mxu0 0.0
    %390 = vmatpush1.msra.mxu0 %v361
    %391 = vmatprep.subr.mxu0 0.0
    %392 = vmatpush1.msra.mxu0 %v362
    %393 = vmatprep.subr.mxu0 0.0
    %394 = vmatpush1.msra.mxu0 %v363
    %395 = vmatprep.subr.mxu0 0.0
    %396 = vmatpush1.msra.mxu0 %v364
    %397 = vmatprep.subr.mxu0 0.0
    %398 = vmatpush1.msra.mxu0 0.0
    %399 = vmatprep.subr.mxu0 0.0
    %400 = vmatpush1.msra.mxu0 0.0
    %401 = vmatprep.subr.mxu0 0.0
    %402 = vmatpush1.msra.mxu0 0.0
    %403 = vmatprep.subr.mxu0 0.0
    %404 = vmatpush1.msra.mxu0 0.0
    %405 = vmatprep.subr.mxu0 0.0
    %406 = vmatpush1.msra.mxu0 0.0
    %407 = vmatprep.subr.mxu0 0.0
    %408 = vmatpush1.msra.mxu0 0.0
    %409 = vmatprep.subr.mxu0 0.0
    %410 = vmatpush1.msra.mxu0 0.0
    %411 = vmatprep.subr.mxu0 0.0
    %412 = vmatpush1.msra.mxu0 0.0
    %413 = vmatprep.subr.mxu0 0.0
    %414 = vmatpush1.msra.mxu0 0.0
    %415 = vmatprep.subr.mxu0 0.0
    %416 = vmatpush1.msra.mxu0 0.0
    %417 = vmatprep.subr.mxu0 0.0
    %418 = vmatpush1.msra.mxu0 0.0
    %419 = vmatprep.subr.mxu0 0.0
    %420 = vmatpush1.msra.mxu0 0.0
    %421 = vmatprep.subr.mxu0 0.0
    %422 = vmatpush1.msra.mxu0 0.0
    %423 = vmatprep.subr.mxu0 0.0
    %424 = vmatpush1.msra.mxu0 0.0
    %425 = vmatprep.subr.mxu0 0.0
    %426 = vmatpush1.msra.mxu0 0.0
    %427 = vmatprep.subr.mxu0 0.0
    %428 = vmatpush1.msra.mxu0 0.0
    %429 = vmatprep.mubr.f32.mxu0 0.0
    %430 = vmatmul.mubr.f32.gmra.mrb[0].mxu0 %v348
    %v431 = vpop.f32.mrb[0].mxu0
    %v432 = vadd.f32 0.0, %v431
    %v433 = vpop.f32.mrb[0].mxu0
    %434 = vdwg.mxu0
    %v435 = vadd.f32 %v258, %v432
    %v436 = vmul.f32 %v435, %v435
    %v437 = vsel %vm168, %v436, 0.0
    %438 = vadd.xlane.f32.xlu0 %v437
    %v439 = vpop.xlane.xlu0 %438
    %v440 = vmul.f32 %v439, %v172
    %v441 = vadd.f32 %v440, 1e-06
    %v442 = vrsqrt.pop %v441
    %v443 = vmul.f32 %v435, %v442
    %s444 = scalar_lea.vmem %s5, 64
    %v445 = vld [vmem:[%s444] sm:$0xff]
    %v446 = vld [vmem:[%s444 + $0x8] sm:$0xff]
    %v447 = vld [vmem:[%s444 + $0x10] sm:$0xff]
    %v448 = vld [vmem:[%s444 + $0x18] sm:$0xff]
    %v449 = vld [vmem:[%s444 + $0x20] sm:$0xff]
    %v450 = vld [vmem:[%s444 + $0x28] sm:$0xff]
    %v451 = vld [vmem:[%s444 + $0x30] sm:$0xff]
    %v452 = vld [vmem:[%s444 + $0x38] sm:$0xff]
    %v454 = vsel %vm168, %v443, 0
    %456 = vmatprep.subr.mxu0 0.0
    %457 = vmatpush1.msra.mxu0 %v445
    %458 = vmatprep.subr.mxu0 0.0
    %459 = vmatpush1.msra.mxu0 %v446
    %460 = vmatprep.subr.mxu0 0.0
    %461 = vmatpush1.msra.mxu0 %v447
    %462 = vmatprep.subr.mxu0 0.0
    %463 = vmatpush1.msra.mxu0 %v448
    %464 = vmatprep.subr.mxu0 0.0
    %465 = vmatpush1.msra.mxu0 %v449
    %466 = vmatprep.subr.mxu0 0.0
    %467 = vmatpush1.msra.mxu0 %v450
    %468 = vmatprep.subr.mxu0 0.0
    %469 = vmatpush1.msra.mxu0 %v451
    %470 = vmatprep.subr.mxu0 0.0
    %471 = vmatpush1.msra.mxu0 %v452
    %472 = vmatprep.subr.mxu0 0.0
    %473 = vmatpush1.msra.mxu0 0.0
    %474 = vmatprep.subr.mxu0 0.0
    %475 = vmatpush1.msra.mxu0 0.0
    %476 = vmatprep.subr.mxu0 0.0
    %477 = vmatpush1.msra.mxu0 0.0
    %478 = vmatprep.subr.mxu0 0.0
    %479 = vmatpush1.msra.mxu0 0.0
    %480 = vmatprep.subr.mxu0 0.0
    %481 = vmatpush1.msra.mxu0 0.0
    %482 = vmatprep.subr.mxu0 0.0
    %483 = vmatpush1.msra.mxu0 0.0
    %484 = vmatprep.subr.mxu0 0.0
    %485 = vmatpush1.msra.mxu0 0.0
    %486 = vmatprep.subr.mxu0 0.0
    %487 = vmatpush1.msra.mxu0 0.0
    %488 = vmatprep.subr.mxu0 0.0
    %489 = vmatpush1.msra.mxu0 0.0
    %490 = vmatprep.subr.mxu0 0.0
    %491 = vmatpush1.msra.mxu0 0.0
    %492 = vmatprep.subr.mxu0 0.0
    %493 = vmatpush1.msra.mxu0 0.0
    %494 = vmatprep.subr.mxu0 0.0
    %495 = vmatpush1.msra.mxu0 0.0
    %496 = vmatprep.subr.mxu0 0.0
    %497 = vmatpush1.msra.mxu0 0.0
    %498 = vmatprep.subr.mxu0 0.0
    %499 = vmatpush1.msra.mxu0 0.0
    %500 = vmatprep.subr.mxu0 0.0
    %501 = vmatpush1.msra.mxu0 0.0
    %502 = vmatprep.subr.mxu0 0.0
    %503 = vmatpush1.msra.mxu0 0.0
    %504 = vmatprep.subr.mxu0 0.0
    %505 = vmatpush1.msra.mxu0 0.0
    %506 = vmatprep.subr.mxu0 0.0
    %507 = vmatpush1.msra.mxu0 0.0
    %508 = vmatprep.subr.mxu0 0.0
    %509 = vmatpush1.msra.mxu0 0.0
    %510 = vmatprep.subr.mxu0 0.0
    %511 = vmatpush1.msra.mxu0 0.0
    %512 = vmatprep.subr.mxu0 0.0
    %513 = vmatpush1.msra.mxu0 0.0
    %514 = vmatprep.subr.mxu0 0.0
    %515 = vmatpush1.msra.mxu0 0.0
    %516 = vmatprep.subr.mxu0 0.0
    %517 = vmatpush1.msra.mxu0 0.0
    %518 = vmatprep.subr.mxu0 0.0
    %519 = vmatpush1.msra.mxu0 0.0
    %520 = vmatprep.mubr.f32.mxu0 0.0
    %521 = vmatmul.mubr.f32.gmra.mrb[0].mxu0 %v454
    %v522 = vpop.f32.mrb[0].mxu0
    %v523 = vadd.f32 0.0, %v522
    %v524 = vpop.f32.mrb[0].mxu0
    %525 = vdwg.mxu0
    %v526 = vadd.f32 %v435, %v523
    %v527 = vmul.f32 %v526, %v526
    %v528 = vsel %vm168, %v527, 0.0
    %529 = vadd.xlane.f32.xlu0 %v528
    %v530 = vpop.xlane.xlu0 %529
    %v531 = vmul.f32 %v530, %v172
    %v532 = vadd.f32 %v531, 1e-06
    %v533 = vrsqrt.pop %v532
    %v534 = vmul.f32 %v526, %v533
    %s535 = scalar_lea.vmem %s6, 64
    %v536 = vld [vmem:[%s535] sm:$0xff]
    %v537 = vld [vmem:[%s535 + $0x8] sm:$0xff]
    %v538 = vld [vmem:[%s535 + $0x10] sm:$0xff]
    %v539 = vld [vmem:[%s535 + $0x18] sm:$0xff]
    %v540 = vld [vmem:[%s535 + $0x20] sm:$0xff]
    %v541 = vld [vmem:[%s535 + $0x28] sm:$0xff]
    %v542 = vld [vmem:[%s535 + $0x30] sm:$0xff]
    %v543 = vld [vmem:[%s535 + $0x38] sm:$0xff]
    %v545 = vsel %vm168, %v534, 0
    %547 = vmatprep.subr.mxu0 0.0
    %548 = vmatpush1.msra.mxu0 %v536
    %549 = vmatprep.subr.mxu0 0.0
    %550 = vmatpush1.msra.mxu0 %v537
    %551 = vmatprep.subr.mxu0 0.0
    %552 = vmatpush1.msra.mxu0 %v538
    %553 = vmatprep.subr.mxu0 0.0
    %554 = vmatpush1.msra.mxu0 %v539
    %555 = vmatprep.subr.mxu0 0.0
    %556 = vmatpush1.msra.mxu0 %v540
    %557 = vmatprep.subr.mxu0 0.0
    %558 = vmatpush1.msra.mxu0 %v541
    %559 = vmatprep.subr.mxu0 0.0
    %560 = vmatpush1.msra.mxu0 %v542
    %561 = vmatprep.subr.mxu0 0.0
    %562 = vmatpush1.msra.mxu0 %v543
    %563 = vmatprep.subr.mxu0 0.0
    %564 = vmatpush1.msra.mxu0 0.0
    %565 = vmatprep.subr.mxu0 0.0
    %566 = vmatpush1.msra.mxu0 0.0
    %567 = vmatprep.subr.mxu0 0.0
    %568 = vmatpush1.msra.mxu0 0.0
    %569 = vmatprep.subr.mxu0 0.0
    %570 = vmatpush1.msra.mxu0 0.0
    %571 = vmatprep.subr.mxu0 0.0
    %572 = vmatpush1.msra.mxu0 0.0
    %573 = vmatprep.subr.mxu0 0.0
    %574 = vmatpush1.msra.mxu0 0.0
    %575 = vmatprep.subr.mxu0 0.0
    %576 = vmatpush1.msra.mxu0 0.0
    %577 = vmatprep.subr.mxu0 0.0
    %578 = vmatpush1.msra.mxu0 0.0
    %579 = vmatprep.subr.mxu0 0.0
    %580 = vmatpush1.msra.mxu0 0.0
    %581 = vmatprep.subr.mxu0 0.0
    %582 = vmatpush1.msra.mxu0 0.0
    %583 = vmatprep.subr.mxu0 0.0
    %584 = vmatpush1.msra.mxu0 0.0
    %585 = vmatprep.subr.mxu0 0.0
    %586 = vmatpush1.msra.mxu0 0.0
    %587 = vmatprep.subr.mxu0 0.0
    %588 = vmatpush1.msra.mxu0 0.0
    %589 = vmatprep.subr.mxu0 0.0
    %590 = vmatpush1.msra.mxu0 0.0
    %591 = vmatprep.subr.mxu0 0.0
    %592 = vmatpush1.msra.mxu0 0.0
    %593 = vmatprep.subr.mxu0 0.0
    %594 = vmatpush1.msra.mxu0 0.0
    %595 = vmatprep.subr.mxu0 0.0
    %596 = vmatpush1.msra.mxu0 0.0
    %597 = vmatprep.subr.mxu0 0.0
    %598 = vmatpush1.msra.mxu0 0.0
    %599 = vmatprep.subr.mxu0 0.0
    %600 = vmatpush1.msra.mxu0 0.0
    %601 = vmatprep.subr.mxu0 0.0
    %602 = vmatpush1.msra.mxu0 0.0
    %603 = vmatprep.subr.mxu0 0.0
    %604 = vmatpush1.msra.mxu0 0.0
    %605 = vmatprep.subr.mxu0 0.0
    %606 = vmatpush1.msra.mxu0 0.0
    %607 = vmatprep.subr.mxu0 0.0
    %608 = vmatpush1.msra.mxu0 0.0
    %609 = vmatprep.subr.mxu0 0.0
    %610 = vmatpush1.msra.mxu0 0.0
    %611 = vmatprep.mubr.f32.mxu0 0.0
    %612 = vmatmul.mubr.f32.gmra.mrb[0].mxu0 %v545
    %v613 = vpop.f32.mrb[0].mxu0
    %v614 = vadd.f32 0.0, %v613
    %v615 = vpop.f32.mrb[0].mxu0
    %616 = vdwg.mxu0
    %v617 = vmax.f32 %v614, 0.0
    %s618 = scalar_lea.vmem %s7, 128
    %v619 = vld [vmem:[%s618] sm:$0xff]
    %v620 = vld [vmem:[%s618 + $0x8] sm:$0xff]
    %v621 = vld [vmem:[%s618 + $0x10] sm:$0xff]
    %v622 = vld [vmem:[%s618 + $0x18] sm:$0xff]
    %v623 = vld [vmem:[%s618 + $0x20] sm:$0xff]
    %v624 = vld [vmem:[%s618 + $0x28] sm:$0xff]
    %v625 = vld [vmem:[%s618 + $0x30] sm:$0xff]
    %v626 = vld [vmem:[%s618 + $0x38] sm:$0xff]
    %v627 = vld [vmem:[%s618 + $0x40] sm:$0xff]
    %v628 = vld [vmem:[%s618 + $0x48] sm:$0xff]
    %v629 = vld [vmem:[%s618 + $0x50] sm:$0xff]
    %v630 = vld [vmem:[%s618 + $0x58] sm:$0xff]
    %v631 = vld [vmem:[%s618 + $0x60] sm:$0xff]
    %v632 = vld [vmem:[%s618 + $0x68] sm:$0xff]
    %v633 = vld [vmem:[%s618 + $0x70] sm:$0xff]
    %v634 = vld [vmem:[%s618 + $0x78] sm:$0xff]
    %635 = vmatprep.subr.mxu0 0.0
    %636 = vmatpush1.msra.mxu0 %v619
    %637 = vmatprep.subr.mxu0 0.0
    %638 = vmatpush1.msra.mxu0 %v620
    %639 = vmatprep.subr.mxu0 0.0
    %640 = vmatpush1.msra.mxu0 %v621
    %641 = vmatprep.subr.mxu0 0.0
    %642 = vmatpush1.msra.mxu0 %v622
    %643 = vmatprep.subr.mxu0 0.0
    %644 = vmatpush1.msra.mxu0 %v623
    %645 = vmatprep.subr.mxu0 0.0
    %646 = vmatpush1.msra.mxu0 %v624
    %647 = vmatprep.subr.mxu0 0.0
    %648 = vmatpush1.msra.mxu0 %v625
    %649 = vmatprep.subr.mxu0 0.0
    %650 = vmatpush1.msra.mxu0 %v626
    %651 = vmatprep.subr.mxu0 0.0
    %652 = vmatpush1.msra.mxu0 %v627
    %653 = vmatprep.subr.mxu0 0.0
    %654 = vmatpush1.msra.mxu0 %v628
    %655 = vmatprep.subr.mxu0 0.0
    %656 = vmatpush1.msra.mxu0 %v629
    %657 = vmatprep.subr.mxu0 0.0
    %658 = vmatpush1.msra.mxu0 %v630
    %659 = vmatprep.subr.mxu0 0.0
    %660 = vmatpush1.msra.mxu0 %v631
    %661 = vmatprep.subr.mxu0 0.0
    %662 = vmatpush1.msra.mxu0 %v632
    %663 = vmatprep.subr.mxu0 0.0
    %664 = vmatpush1.msra.mxu0 %v633
    %665 = vmatprep.subr.mxu0 0.0
    %666 = vmatpush1.msra.mxu0 %v634
    %667 = vmatprep.subr.mxu0 0.0
    %668 = vmatpush1.msra.mxu0 0.0
    %669 = vmatprep.subr.mxu0 0.0
    %670 = vmatpush1.msra.mxu0 0.0
    %671 = vmatprep.subr.mxu0 0.0
    %672 = vmatpush1.msra.mxu0 0.0
    %673 = vmatprep.subr.mxu0 0.0
    %674 = vmatpush1.msra.mxu0 0.0
    %675 = vmatprep.subr.mxu0 0.0
    %676 = vmatpush1.msra.mxu0 0.0
    %677 = vmatprep.subr.mxu0 0.0
    %678 = vmatpush1.msra.mxu0 0.0
    %679 = vmatprep.subr.mxu0 0.0
    %680 = vmatpush1.msra.mxu0 0.0
    %681 = vmatprep.subr.mxu0 0.0
    %682 = vmatpush1.msra.mxu0 0.0
    %683 = vmatprep.subr.mxu0 0.0
    %684 = vmatpush1.msra.mxu0 0.0
    %685 = vmatprep.subr.mxu0 0.0
    %686 = vmatpush1.msra.mxu0 0.0
    %687 = vmatprep.subr.mxu0 0.0
    %688 = vmatpush1.msra.mxu0 0.0
    %689 = vmatprep.subr.mxu0 0.0
    %690 = vmatpush1.msra.mxu0 0.0
    %691 = vmatprep.subr.mxu0 0.0
    %692 = vmatpush1.msra.mxu0 0.0
    %693 = vmatprep.subr.mxu0 0.0
    %694 = vmatpush1.msra.mxu0 0.0
    %695 = vmatprep.subr.mxu0 0.0
    %696 = vmatpush1.msra.mxu0 0.0
    %697 = vmatprep.subr.mxu0 0.0
    %698 = vmatpush1.msra.mxu0 0.0
    %699 = vmatprep.mubr.f32.mxu0 0.0
    %700 = vmatmul.mubr.f32.gmra.mrb[0].mxu0 %v617
    %v701 = vpop.f32.mrb[0].mxu0
    %v702 = vadd.f32 0.0, %v701
    %v703 = vpop.f32.mrb[0].mxu0
    %704 = vdwg.mxu0
    %v705 = vadd.f32 %v526, %v702
    %v706 = vmul.f32 %v705, %v705
    %v707 = vsel %vm168, %v706, 0.0
    %708 = vadd.xlane.f32.xlu0 %v707
    %v709 = vpop.xlane.xlu0 %708
    %v710 = vmul.f32 %v709, %v172
    %v711 = vadd.f32 %v710, 1e-06
    %v712 = vrsqrt.pop %v711
    %v713 = vmul.f32 %v705, %v712
    %v714 = vld [vmem:[%s8] sm:$0x1]
    %v716 = vlaneseq
    %v717 = vshrl.u32 %v716, 7
    %v718 = vsub.s32 0, %v717
    %v719 = vrot.slane %v714, %v718
    %v721 = vmul.f32 %v713, %v719
    %v722 = vsel %vm168, %v721, 0.0
    %v723 = vrot.slane %v722, 4
    %v724 = vadd.f32 %v722, %v723
    %v725 = vrot.slane %v724, 2
    %v726 = vadd.f32 %v724, %v725
    %v727 = vrot.slane %v726, 1
    %v728 = vadd.f32 %v726, %v727
    %v729 = vrcp.pop 8.0
    %v730 = vmul.f32 %v728, %v729
    %v731 = vsub.f32 %v721, %v730
    %v732 = vmul.f32 %v731, %v731
    %v733 = vsel %vm168, %v732, 0.0
    %v734 = vrot.slane %v733, 4
    %v735 = vadd.f32 %v733, %v734
    %v736 = vrot.slane %v735, 2
    %v737 = vadd.f32 %v735, %v736
    %v738 = vrot.slane %v737, 1
    %v739 = vadd.f32 %v737, %v738
    %v740 = vmul.f32 %v739, %v729
    %v741 = vadd.f32 %v740, 1e-05
    %v742 = vrsqrt.pop %v741
    %v743 = vmul.f32 %v731, %v742
    %v744 = vld [vmem:[%s9] sm:$0xff]
    %v745 = vld [vmem:[%s9 + $0x8] sm:$0xff]
    %v746 = vld [vmem:[%s9 + $0x10] sm:$0xff]
    %v747 = vld [vmem:[%s9 + $0x18] sm:$0xff]
    %v748 = vld [vmem:[%s9 + $0x20] sm:$0xff]
    %v749 = vld [vmem:[%s9 + $0x28] sm:$0xff]
    %v750 = vld [vmem:[%s9 + $0x30] sm:$0xff]
    %v751 = vld [vmem:[%s9 + $0x38] sm:$0xff]
    %v752 = vld [vmem:[%s10] sm:$0x1]
    %v754 = vlaneseq
    %v755 = vshrl.u32 %v754, 7
    %v756 = vsub.s32 0, %v755
    %v757 = vrot.slane %v752, %v756
    %v760 = vsel %vm168, %v743, 0
    %762 = vmatprep.subr.mxu0 0.0
    %763 = vmatpush1.msra.mxu0 %v744
    %764 = vmatprep.subr.mxu0 0.0
    %765 = vmatpush1.msra.mxu0 %v745
    %766 = vmatprep.subr.mxu0 0.0
    %767 = vmatpush1.msra.mxu0 %v746
    %768 = vmatprep.subr.mxu0 0.0
    %769 = vmatpush1.msra.mxu0 %v747
    %770 = vmatprep.subr.mxu0 0.0
    %771 = vmatpush1.msra.mxu0 %v748
    %772 = vmatprep.subr.mxu0 0.0
    %773 = vmatpush1.msra.mxu0 %v749
    %774 = vmatprep.subr.mxu0 0.0
    %775 = vmatpush1.msra.mxu0 %v750
    %776 = vmatprep.subr.mxu0 0.0
    %777 = vmatpush1.msra.mxu0 %v751
    %778 = vmatprep.subr.mxu0 0.0
    %779 = vmatpush1.msra.mxu0 0.0
    %780 = vmatprep.subr.mxu0 0.0
    %781 = vmatpush1.msra.mxu0 0.0
    %782 = vmatprep.subr.mxu0 0.0
    %783 = vmatpush1.msra.mxu0 0.0
    %784 = vmatprep.subr.mxu0 0.0
    %785 = vmatpush1.msra.mxu0 0.0
    %786 = vmatprep.subr.mxu0 0.0
    %787 = vmatpush1.msra.mxu0 0.0
    %788 = vmatprep.subr.mxu0 0.0
    %789 = vmatpush1.msra.mxu0 0.0
    %790 = vmatprep.subr.mxu0 0.0
    %791 = vmatpush1.msra.mxu0 0.0
    %792 = vmatprep.subr.mxu0 0.0
    %793 = vmatpush1.msra.mxu0 0.0
    %794 = vmatprep.subr.mxu0 0.0
    %795 = vmatpush1.msra.mxu0 0.0
    %796 = vmatprep.subr.mxu0 0.0
    %797 = vmatpush1.msra.mxu0 0.0
    %798 = vmatprep.subr.mxu0 0.0
    %799 = vmatpush1.msra.mxu0 0.0
    %800 = vmatprep.subr.mxu0 0.0
    %801 = vmatpush1.msra.mxu0 0.0
    %802 = vmatprep.subr.mxu0 0.0
    %803 = vmatpush1.msra.mxu0 0.0
    %804 = vmatprep.subr.mxu0 0.0
    %805 = vmatpush1.msra.mxu0 0.0
    %806 = vmatprep.subr.mxu0 0.0
    %807 = vmatpush1.msra.mxu0 0.0
    %808 = vmatprep.subr.mxu0 0.0
    %809 = vmatpush1.msra.mxu0 0.0
    %810 = vmatprep.subr.mxu0 0.0
    %811 = vmatpush1.msra.mxu0 0.0
    %812 = vmatprep.subr.mxu0 0.0
    %813 = vmatpush1.msra.mxu0 0.0
    %814 = vmatprep.subr.mxu0 0.0
    %815 = vmatpush1.msra.mxu0 0.0
    %816 = vmatprep.subr.mxu0 0.0
    %817 = vmatpush1.msra.mxu0 0.0
    %818 = vmatprep.subr.mxu0 0.0
    %819 = vmatpush1.msra.mxu0 0.0
    %820 = vmatprep.subr.mxu0 0.0
    %821 = vmatpush1.msra.mxu0 0.0
    %822 = vmatprep.subr.mxu0 0.0
    %823 = vmatpush1.msra.mxu0 0.0
    %824 = vmatprep.subr.mxu0 0.0
    %825 = vmatpush1.msra.mxu0 0.0
    %826 = vmatprep.mubr.f32.mxu0 0.0
    %827 = vmatmul.mubr.f32.gmra.mrb[0].mxu0 %v760
    %v828 = vpop.f32.mrb[0].mxu0
    %v829 = vadd.f32 %v757, %v828
    %v830 = vpop.f32.mrb[0].mxu0
    %831 = vdwg.mxu0
    %v832 = vmax.f32 %v829, 0.0
    %v833 = vld [vmem:[%s11] sm:$0xff]
    %v834 = vld [vmem:[%s11 + $0x8] sm:$0xff]
    %v835 = vld [vmem:[%s11 + $0x10] sm:$0xff]
    %v836 = vld [vmem:[%s11 + $0x18] sm:$0xff]
    %v837 = vld [vmem:[%s11 + $0x20] sm:$0xff]
    %v838 = vld [vmem:[%s11 + $0x28] sm:$0xff]
    %v839 = vld [vmem:[%s11 + $0x30] sm:$0xff]
    %v840 = vld [vmem:[%s11 + $0x38] sm:$0xff]
    %v841 = vld [vmem:[%s12] sm:$0x1]
    %v843 = vlaneseq
    %v844 = vshrl.u32 %v843, 7
    %v845 = vsub.s32 0, %v844
    %v846 = vrot.slane %v841, %v845
    %v849 = vsel %vm168, %v832, 0
    %851 = vmatprep.subr.mxu0 0.0
    %852 = vmatpush1.msra.mxu0 %v833
    %853 = vmatprep.subr.mxu0 0.0
    %854 = vmatpush1.msra.mxu0 %v834
    %855 = vmatprep.subr.mxu0 0.0
    %856 = vmatpush1.msra.mxu0 %v835
    %857 = vmatprep.subr.mxu0 0.0
    %858 = vmatpush1.msra.mxu0 %v836
    %859 = vmatprep.subr.mxu0 0.0
    %860 = vmatpush1.msra.mxu0 %v837
    %861 = vmatprep.subr.mxu0 0.0
    %862 = vmatpush1.msra.mxu0 %v838
    %863 = vmatprep.subr.mxu0 0.0
    %864 = vmatpush1.msra.mxu0 %v839
    %865 = vmatprep.subr.mxu0 0.0
    %866 = vmatpush1.msra.mxu0 %v840
    %867 = vmatprep.subr.mxu0 0.0
    %868 = vmatpush1.msra.mxu0 0.0
    %869 = vmatprep.subr.mxu0 0.0
    %870 = vmatpush1.msra.mxu0 0.0
    %871 = vmatprep.subr.mxu0 0.0
    %872 = vmatpush1.msra.mxu0 0.0
    %873 = vmatprep.subr.mxu0 0.0
    %874 = vmatpush1.msra.mxu0 0.0
    %875 = vmatprep.subr.mxu0 0.0
    %876 = vmatpush1.msra.mxu0 0.0
    %877 = vmatprep.subr.mxu0 0.0
    %878 = vmatpush1.msra.mxu0 0.0
    %879 = vmatprep.subr.mxu0 0.0
    %880 = vmatpush1.msra.mxu0 0.0
    %881 = vmatprep.subr.mxu0 0.0
    %882 = vmatpush1.msra.mxu0 0.0
    %883 = vmatprep.subr.mxu0 0.0
    %884 = vmatpush1.msra.mxu0 0.0
    %885 = vmatprep.subr.mxu0 0.0
    %886 = vmatpush1.msra.mxu0 0.0
    %887 = vmatprep.subr.mxu0 0.0
    %888 = vmatpush1.msra.mxu0 0.0
    %889 = vmatprep.subr.mxu0 0.0
    %890 = vmatpush1.msra.mxu0 0.0
    %891 = vmatprep.subr.mxu0 0.0
    %892 = vmatpush1.msra.mxu0 0.0
    %893 = vmatprep.subr.mxu0 0.0
    %894 = vmatpush1.msra.mxu0 0.0
    %895 = vmatprep.subr.mxu0 0.0
    %896 = vmatpush1.msra.mxu0 0.0
    %897 = vmatprep.subr.mxu0 0.0
    %898 = vmatpush1.msra.mxu0 0.0
    %899 = vmatprep.subr.mxu0 0.0
    %900 = vmatpush1.msra.mxu0 0.0
    %901 = vmatprep.subr.mxu0 0.0
    %902 = vmatpush1.msra.mxu0 0.0
    %903 = vmatprep.subr.mxu0 0.0
    %904 = vmatpush1.msra.mxu0 0.0
    %905 = vmatprep.subr.mxu0 0.0
    %906 = vmatpush1.msra.mxu0 0.0
    %907 = vmatprep.subr.mxu0 0.0
    %908 = vmatpush1.msra.mxu0 0.0
    %909 = vmatprep.subr.mxu0 0.0
    %910 = vmatpush1.msra.mxu0 0.0
    %911 = vmatprep.subr.mxu0 0.0
    %912 = vmatpush1.msra.mxu0 0.0
    %913 = vmatprep.subr.mxu0 0.0
    %914 = vmatpush1.msra.mxu0 0.0
    %915 = vmatprep.mubr.f32.mxu0 0.0
    %916 = vmatmul.mubr.f32.gmra.mrb[0].mxu0 %v849
    %v917 = vpop.f32.mrb[0].mxu0
    %v918 = vadd.f32 %v846, %v917
    %v919 = vpop.f32.mrb[0].mxu0
    %920 = vdwg.mxu0
    %v921 = vmax.f32 %v918, 0.0
    %v922 = vld [vmem:[%s13] sm:$0x1]
    %v924 = vlaneseq
    %v925 = vshrl.u32 %v924, 7
    %v926 = vsub.s32 0, %v925
    %v927 = vrot.slane %v922, %v926
    %v929 = vmul.f32 %v921, %v927
    %v930 = vsel %vm168, %v929, 0.0
    %931 = vadd.xlane.f32.xlu0 %v930
    %v932 = vpop.xlane.xlu0 %931
    %v933 = vld [vmem:[#allocation2] sm:$0x1]
    %v935 = vlaneseq
    %v936 = vshrl.u32 %v935, 7
    %v937 = vsub.s32 0, %v936
    %v938 = vrot.slane %v933, %v937
    %v940 = vadd.f32 %v932, %v938
    %vm941 = vcmask 7168
    %942 = vst.msk [vmem:[%s15] sm:$0xff] %vm941, %v940
    // Predicated region
    $region66: #{tpu_custom_call.1} parent=1 // pred_check
      _
    $region67: #{tpu_custom_call.1} parent=1 // pred_check_branch
      %944 = sbr.rel (0) target = $region69
    $region68: #{tpu_custom_call.1} parent=1 // pred_region
      _
    $region69: #{tpu_custom_call.1} parent=1 // pred_fallthru
      _
    // Predicated region
    $region70: #{tpu_custom_call.1} parent=1 // pred_check
      _
    $region71: #{tpu_custom_call.1} parent=1 // pred_check_branch
      %946 = sbr.rel (0) target = $region73
    $region72: #{tpu_custom_call.1} parent=1 // pred_region
      _
    $region73: #{tpu_custom_call.1} parent=1 // pred_fallthru
      _
    %947 = vsyncpa [#allocation4], 1

</llo_original>
